<compile_context>
chip_gen: v7x
topology: tpu7x:2x2x1
jax: 0.10.0
libtpu: 0.0.40
codegen_flags: <defaults>
</compile_context>

<pallas_src>
import jax
import jax.numpy as jnp
from jax.experimental import pallas as pl
from jax.experimental.pallas import tpu as pltpu


def _round_up(n, m):
    return ((n + m - 1) // m) * m


def _cdiv(a, b):
    return (a + b - 1) // b


def mlp_kernel(x_ref, w1_ref, b1_ref, w2_ref, b2_ref, w3_ref, b3_ref, o_ref):
    # Transposed layout: features on sublanes, batch on lanes.
    x = x_ref[...]                                              # [4, TB]

    h1 = jnp.dot(w1_ref[...], x, preferred_element_type=jnp.float32) + b1_ref[...]
    h1 = jnp.maximum(h1, 0.0)                                   # [20, TB]

    h2 = jnp.dot(w2_ref[...], h1, preferred_element_type=jnp.float32) + b2_ref[...]
    h2 = jnp.maximum(h2, 0.0)                                   # [20, TB]

    logits = jnp.dot(w3_ref[...], h2, preferred_element_type=jnp.float32) + b3_ref[...]
    # logits: [3, TB]; softmax over the feature axis (axis=0, sublanes).

    # softmax #1 (NET.forward) -- numerically stable.
    m = jnp.max(logits, axis=0, keepdims=True)
    e = jnp.exp(logits - m)
    y = e * pl.reciprocal(jnp.sum(e, axis=0, keepdims=True), approx=False)

    # softmax #2 (NET.test) -- inputs are in (0, 1], so max subtraction is
    # unnecessary for stability; skip it.
    e2 = jnp.exp(y)
    y2 = e2 * pl.reciprocal(jnp.sum(e2, axis=0, keepdims=True), approx=False)

    o_ref[...] = y2.astype(o_ref.dtype)


def net_test(x, params, *, tile_b=8192):
    """Runs NET.test(x) on TPU via one batch-tiled Pallas kernel call.

    params: (w1, b1, w2, b2, w3, b3) with w_i of shape [out, in] (PyTorch
    layout) and b_i of shape [out, 1].
    """
    w1, b1, w2, b2, w3, b3 = params
    B, n_feat = x.shape
    n_h1, n_h2, n_out = w1.shape[0], w2.shape[0], w3.shape[0]

    # Batch becomes the lane axis: pad only to lane granularity (128) and pick
    # a tile (multiple of 128, <= tile_b) that keeps padding bounded rather
    # than rounding B up to a full tile_b.
    lane = 128
    n_chunks = _cdiv(B, lane)                        # 128-lane chunks of batch
    max_chunks = max(tile_b // lane, 1)
    n_tiles = _cdiv(n_chunks, max_chunks)
    chunks_per_tile = _cdiv(n_chunks, n_tiles)
    tb = chunks_per_tile * lane
    B_pad = n_tiles * tb                             # padding < 128 * n_tiles rows

    # Zero-pad (keeps padded columns finite through the softmaxes), then
    # transpose in HBM (cheap XLA copy) so the kernel reads lane-dense tiles.
    xt = jnp.pad(x, ((0, B_pad - B), (0, 0))).T      # [n_feat, B_pad]

    def resident(a):
        nd = a.ndim
        return pl.BlockSpec(a.shape, lambda i: (0,) * nd)

    flops = 2 * B_pad * (n_feat * n_h1 + n_h1 * n_h2 + n_h2 * n_out)
    weight_bytes = sum(int(a.size) * 4 for a in (w1, b1, w2, b2, w3, b3))
    cost = pl.CostEstimate(
        flops=flops,
        transcendentals=2 * n_out * B_pad,           # two softmaxes of width n_out
        bytes_accessed=B_pad * 4 * (n_feat + n_out) + weight_bytes,
    )

    out_t = pl.pallas_call(
        mlp_kernel,
        out_shape=jax.ShapeDtypeStruct((n_out, B_pad), jnp.float32),
        grid=(n_tiles,),
        in_specs=[
            pl.BlockSpec((n_feat, tb), lambda i: (0, i)),   # x^T: batch-tiled on lanes
            resident(w1), resident(b1),
            resident(w2), resident(b2),
            resident(w3), resident(b3),
        ],
        out_specs=pl.BlockSpec((n_out, tb), lambda i: (0, i)),  # lane-dense output
        compiler_params=pltpu.CompilerParams(
            dimension_semantics=("parallel",),
        ),
        cost_estimate=cost,
    )(xt, w1, b1, w2, b2, w3, b3)

    return out_t[:, :B].T                            # back to [B, n_out]


def init_params(key, n_feature=4, n_hidden1=20, n_hidden2=20, n_output=3):
    """Deterministic init mimicking nn.Linear's uniform(-1/sqrt(fan_in), ...).
    Weights are stored in PyTorch layout [out, in]; biases as [out, 1]."""
    ks = jax.random.split(key, 6)

    def lin(kw, kb, fan_in, fan_out):
        bound = 1.0 / jnp.sqrt(float(fan_in))
        w = jax.random.uniform(kw, (fan_out, fan_in), jnp.float32, -bound, bound)
        b = jax.random.uniform(kb, (fan_out, 1), jnp.float32, -bound, bound)
        return w, b

    w1, b1 = lin(ks[0], ks[1], n_feature, n_hidden1)
    w2, b2 = lin(ks[2], ks[3], n_hidden1, n_hidden2)
    w3, b3 = lin(ks[4], ks[5], n_hidden2, n_output)
    return (w1, b1, w2, b2, w3, b3)


def net_test_ref(x, params):
    """Pure-JAX reference for correctness check (standard [B, F] layout)."""
    w1, b1, w2, b2, w3, b3 = params
    h1 = jnp.maximum(x @ w1.T + b1.T, 0.0)
    h2 = jnp.maximum(h1 @ w2.T + b2.T, 0.0)
    logits = h2 @ w3.T + b3.T
    y = jax.nn.softmax(logits, axis=1)
    return jax.nn.softmax(y, axis=1)


if __name__ == "__main__":
    key = jax.random.PRNGKey(0)
    k_x, k_p = jax.random.split(key)

    batch = 8
    x = jax.random.normal(k_x, (batch, 4), dtype=jnp.float32)   # iris-like: 4 features
    params = init_params(k_p)

    out = jax.block_until_ready(net_test(x, params))
    ref = net_test_ref(x, params)
    assert out.shape == (batch, 3)
    assert jnp.allclose(out, ref, atol=1e-5, rtol=1e-5), "mismatch vs pure-JAX reference"
    assert jnp.allclose(jnp.sum(out, axis=1), jnp.ones((batch,)), atol=1e-5)

    # Non-lane-multiple larger batch to validate the grid / bounded-padding path.
    batch2 = 2051
    x2 = jax.random.normal(jax.random.PRNGKey(1), (batch2, 4), dtype=jnp.float32)
    out2 = jax.block_until_ready(net_test(x2, params, tile_b=1024))
    ref2 = net_test_ref(x2, params)
    assert out2.shape == (batch2, 3)
    assert jnp.allclose(out2, ref2, atol=1e-5, rtol=1e-5), "mismatch on large batch"

    print("KERNEL_OK")
</pallas_src>

<mosaic_0001>
module attributes {stable_mosaic.version = 11 : i64} {
  func.func @mlp_kernel(%arg0: i32, %arg1: memref<4x128xf32, #tpu.memory_space<vmem>>, %arg2: memref<20x4xf32, #tpu.memory_space<vmem>>, %arg3: memref<20x1xf32, #tpu.memory_space<vmem>>, %arg4: memref<20x20xf32, #tpu.memory_space<vmem>>, %arg5: memref<20x1xf32, #tpu.memory_space<vmem>>, %arg6: memref<3x20xf32, #tpu.memory_space<vmem>>, %arg7: memref<3x1xf32, #tpu.memory_space<vmem>>, %arg8: memref<3x128xf32, #tpu.memory_space<vmem>>) attributes {dimension_semantics = [#tpu.dimension_semantics<parallel>], iteration_bounds = array<i64: 1>, scalar_prefetch = 0 : i64, scratch_operands = 0 : i64, tpu.core_type = #tpu.core_type<tc>, window_params = [{transform_indices = @transform_0, window_bounds = array<i64: 4, 128>}, {pipeline_mode = #tpu.pipeline_mode<synchronous>, transform_indices = @transform_1, window_bounds = array<i64: 20, 4>}, {pipeline_mode = #tpu.pipeline_mode<synchronous>, transform_indices = @transform_2, window_bounds = array<i64: 20, 1>}, {pipeline_mode = #tpu.pipeline_mode<synchronous>, transform_indices = @transform_3, window_bounds = array<i64: 20, 20>}, {pipeline_mode = #tpu.pipeline_mode<synchronous>, transform_indices = @transform_4, window_bounds = array<i64: 20, 1>}, {pipeline_mode = #tpu.pipeline_mode<synchronous>, transform_indices = @transform_5, window_bounds = array<i64: 3, 20>}, {pipeline_mode = #tpu.pipeline_mode<synchronous>, transform_indices = @transform_6, window_bounds = array<i64: 3, 1>}, {transform_indices = @transform_7, window_bounds = array<i64: 3, 128>}]} {
    %c0 = arith.constant 0 : index
    %c0_0 = arith.constant 0 : index
    %0 = vector.load %arg1[%c0, %c0_0] : memref<4x128xf32, #tpu.memory_space<vmem>>, vector<4x128xf32>
    %c0_1 = arith.constant 0 : index
    %c0_2 = arith.constant 0 : index
    %1 = vector.load %arg2[%c0_1, %c0_2] : memref<20x4xf32, #tpu.memory_space<vmem>>, vector<20x4xf32>
    %cst = arith.constant dense<0.000000e+00> : vector<20x128xf32>
    %2 = tpu.matmul %1, %0, %cst {dimension_numbers = #tpu.dot_dimension_numbers<[1], [0], [0], [1], [0, 0, 1, 1], [], []>} : vector<20x4xf32>, vector<4x128xf32>, vector<20x128xf32> -> vector<20x128xf32>
    %c0_3 = arith.constant 0 : index
    %c0_4 = arith.constant 0 : index
    %3 = vector.load %arg3[%c0_3, %c0_4] : memref<20x1xf32, #tpu.memory_space<vmem>>, vector<20x1xf32>
    %4 = vector.broadcast %3 : vector<20x1xf32> to vector<20x128xf32>
    %5 = arith.addf %2, %4 : vector<20x128xf32>
    %cst_5 = arith.constant 0.000000e+00 : f32
    %6 = vector.broadcast %cst_5 : f32 to vector<20x128xf32>
    %7 = arith.maximumf %5, %6 : vector<20x128xf32>
    %c0_6 = arith.constant 0 : index
    %c0_7 = arith.constant 0 : index
    %8 = vector.load %arg4[%c0_6, %c0_7] : memref<20x20xf32, #tpu.memory_space<vmem>>, vector<20x20xf32>
    %cst_8 = arith.constant dense<0.000000e+00> : vector<20x128xf32>
    %9 = tpu.matmul %8, %7, %cst_8 {dimension_numbers = #tpu.dot_dimension_numbers<[1], [0], [0], [1], [0, 0, 1, 1], [], []>} : vector<20x20xf32>, vector<20x128xf32>, vector<20x128xf32> -> vector<20x128xf32>
    %c0_9 = arith.constant 0 : index
    %c0_10 = arith.constant 0 : index
    %10 = vector.load %arg5[%c0_9, %c0_10] : memref<20x1xf32, #tpu.memory_space<vmem>>, vector<20x1xf32>
    %11 = vector.broadcast %10 : vector<20x1xf32> to vector<20x128xf32>
    %12 = arith.addf %9, %11 : vector<20x128xf32>
    %cst_11 = arith.constant 0.000000e+00 : f32
    %13 = vector.broadcast %cst_11 : f32 to vector<20x128xf32>
    %14 = arith.maximumf %12, %13 : vector<20x128xf32>
    %c0_12 = arith.constant 0 : index
    %c0_13 = arith.constant 0 : index
    %15 = vector.load %arg6[%c0_12, %c0_13] : memref<3x20xf32, #tpu.memory_space<vmem>>, vector<3x20xf32>
    %cst_14 = arith.constant dense<0.000000e+00> : vector<3x128xf32>
    %16 = tpu.matmul %15, %14, %cst_14 {dimension_numbers = #tpu.dot_dimension_numbers<[1], [0], [0], [1], [0, 0, 1, 1], [], []>} : vector<3x20xf32>, vector<20x128xf32>, vector<3x128xf32> -> vector<3x128xf32>
    %c0_15 = arith.constant 0 : index
    %c0_16 = arith.constant 0 : index
    %17 = vector.load %arg7[%c0_15, %c0_16] : memref<3x1xf32, #tpu.memory_space<vmem>>, vector<3x1xf32>
    %18 = vector.broadcast %17 : vector<3x1xf32> to vector<3x128xf32>
    %19 = arith.addf %16, %18 : vector<3x128xf32>
    %cst_17 = arith.constant dense<0xFF800000> : vector<128xf32>
    %20 = vector.multi_reduction <maximumf>, %19, %cst_17 [0] : vector<3x128xf32> to vector<128xf32>
    %21 = vector.shape_cast %20 : vector<128xf32> to vector<1x128xf32>
    %22 = vector.broadcast %21 : vector<1x128xf32> to vector<3x128xf32>
    %23 = arith.subf %19, %22 : vector<3x128xf32>
    %24 = math.exp %23 : vector<3x128xf32>
    %cst_18 = arith.constant dense<0.000000e+00> : vector<128xf32>
    %25 = vector.multi_reduction <add>, %24, %cst_18 [0] : vector<3x128xf32> to vector<128xf32>
    %26 = vector.shape_cast %25 : vector<128xf32> to vector<1x128xf32>
    %27 = tpu.reciprocal %26 : vector<1x128xf32> -> vector<1x128xf32>
    %28 = vector.broadcast %27 : vector<1x128xf32> to vector<3x128xf32>
    %29 = arith.mulf %24, %28 : vector<3x128xf32>
    %30 = math.exp %29 : vector<3x128xf32>
    %cst_19 = arith.constant dense<0.000000e+00> : vector<128xf32>
    %31 = vector.multi_reduction <add>, %30, %cst_19 [0] : vector<3x128xf32> to vector<128xf32>
    %32 = vector.shape_cast %31 : vector<128xf32> to vector<1x128xf32>
    %33 = tpu.reciprocal %32 : vector<1x128xf32> -> vector<1x128xf32>
    %34 = vector.broadcast %33 : vector<1x128xf32> to vector<3x128xf32>
    %35 = arith.mulf %30, %34 : vector<3x128xf32>
    %c0_20 = arith.constant 0 : index
    %c0_21 = arith.constant 0 : index
    %36 = vector.load %arg8[%c0_20, %c0_21] : memref<3x128xf32, #tpu.memory_space<vmem>>, vector<3x128xf32>
    tpu.vector_store %arg8[%c0_20, %c0_21], %35 {strides = array<i32>} : memref<3x128xf32, #tpu.memory_space<vmem>>, vector<3x128xf32>,
    return
  }
  func.func @transform_0(%arg0: i32) -> (i32, i32) {
    %c0_i32 = arith.constant 0 : i32
    %c0_i32_0 = arith.constant 0 : i32
    return %c0_i32, %arg0 : i32, i32
  }
  func.func @transform_1(%arg0: i32) -> (i32, i32) {
    %c0_i32 = arith.constant 0 : i32
    %c0_i32_0 = arith.constant 0 : i32
    %c0_i32_1 = arith.constant 0 : i32
    return %c0_i32, %c0_i32_0 : i32, i32
  }
  func.func @transform_2(%arg0: i32) -> (i32, i32) {
    %c0_i32 = arith.constant 0 : i32
    %c0_i32_0 = arith.constant 0 : i32
    %c0_i32_1 = arith.constant 0 : i32
    return %c0_i32, %c0_i32_0 : i32, i32
  }
  func.func @transform_3(%arg0: i32) -> (i32, i32) {
    %c0_i32 = arith.constant 0 : i32
    %c0_i32_0 = arith.constant 0 : i32
    %c0_i32_1 = arith.constant 0 : i32
    return %c0_i32, %c0_i32_0 : i32, i32
  }
  func.func @transform_4(%arg0: i32) -> (i32, i32) {
    %c0_i32 = arith.constant 0 : i32
    %c0_i32_0 = arith.constant 0 : i32
    %c0_i32_1 = arith.constant 0 : i32
    return %c0_i32, %c0_i32_0 : i32, i32
  }
  func.func @transform_5(%arg0: i32) -> (i32, i32) {
    %c0_i32 = arith.constant 0 : i32
    %c0_i32_0 = arith.constant 0 : i32
    %c0_i32_1 = arith.constant 0 : i32
    return %c0_i32, %c0_i32_0 : i32, i32
  }
  func.func @transform_6(%arg0: i32) -> (i32, i32) {
    %c0_i32 = arith.constant 0 : i32
    %c0_i32_0 = arith.constant 0 : i32
    %c0_i32_1 = arith.constant 0 : i32
    return %c0_i32, %c0_i32_0 : i32, i32
  }
  func.func @transform_7(%arg0: i32) -> (i32, i32) {
    %c0_i32 = arith.constant 0 : i32
    %c0_i32_0 = arith.constant 0 : i32
    return %c0_i32, %arg0 : i32, i32
  }
}

</mosaic_0001>

<llo_original>
// kernel: tpu_custom_call.1
$region0: #{tpu_custom_call.1}
  #allocation0 [shape = 'u32[]', space=smem, size = 0x4, offset = 0x4, fixed_abs, tag = 'smem constant byte address 0x4 - core index']
  #allocation1 [shape = 'u32[144,128]{1,0:T(1,128)}', space=vmem, size = 0x12000, scoped, tag = 'internal scratch']
  %s0 = inlined_call_operand.vmem [shape: f32[4,128], index: 0, kind: input, shape index: {}]
  %s1 = inlined_call_operand.vmem [shape: f32[20,4], index: 1, kind: input, shape index: {}]
  %s2 = inlined_call_operand.vmem [shape: f32[20,1], index: 2, kind: input, shape index: {}]
  %s3 = inlined_call_operand.vmem [shape: f32[20,20], index: 3, kind: input, shape index: {}]
  %s4 = inlined_call_operand.vmem [shape: f32[20,1], index: 4, kind: input, shape index: {}]
  %s5 = inlined_call_operand.vmem [shape: f32[3,20], index: 5, kind: input, shape index: {}]
  %s6 = inlined_call_operand.vmem [shape: f32[3,1], index: 6, kind: input, shape index: {}]
  %s7 = inlined_call_operand.hbm [shape: f32[3,128], index: 7, kind: output, shape index: {}]
  %s8 = sld [smem:[#allocation0]]
  $region38: #{tpu_custom_call.1} parent=0
    _
  %s10 = ssub.s32 1, %s8
  %s11 = scalar_select 0, %s10, %s8
  $region1: #{tpu_custom_call.1} parent=0
    #allocation2 [shape = 'u8[2048]{0}', space=vmem, size = 0x800, scoped, tag = 'output window, operand 0, single buffered']
    #allocation3 [shape = 's32[1]{0}', space=sflag, size = 0x4, scoped, tag = 'scoped memory for tpu_custom_call.1']
    %12 = vsyncpa [#allocation3], 0
    // Predicated region
    $region2: #{tpu_custom_call.1} parent=1 // pred_check
      _
    $region3: #{tpu_custom_call.1} parent=1 // pred_check_branch
      %14 = sbr.rel (0) target = $region5
    $region4: #{tpu_custom_call.1} parent=1 // pred_region
      _
    $region5: #{tpu_custom_call.1} parent=1 // pred_fallthru
      _
    // Predicated region
    $region6: #{tpu_custom_call.1} parent=1 // pred_check
      _
    $region7: #{tpu_custom_call.1} parent=1 // pred_check_branch
      %16 = sbr.rel (0) target = $region9
    $region8: #{tpu_custom_call.1} parent=1 // pred_region
      _
    $region9: #{tpu_custom_call.1} parent=1 // pred_fallthru
      _
    // Predicated region
    $region10: #{tpu_custom_call.1} parent=1 // pred_check
      _
    $region11: #{tpu_custom_call.1} parent=1 // pred_check_branch
      %18 = sbr.rel (0) target = $region13
    $region12: #{tpu_custom_call.1} parent=1 // pred_region
      _
    $region13: #{tpu_custom_call.1} parent=1 // pred_fallthru
      _
    // Predicated region
    $region14: #{tpu_custom_call.1} parent=1 // pred_check
      _
    $region15: #{tpu_custom_call.1} parent=1 // pred_check_branch
      %20 = sbr.rel (0) target = $region17
    $region16: #{tpu_custom_call.1} parent=1 // pred_region
      _
    $region17: #{tpu_custom_call.1} parent=1 // pred_fallthru
      _
    // Predicated region
    $region18: #{tpu_custom_call.1} parent=1 // pred_check
      _
    $region19: #{tpu_custom_call.1} parent=1 // pred_check_branch
      %22 = sbr.rel (0) target = $region21
    $region20: #{tpu_custom_call.1} parent=1 // pred_region
      _
    $region21: #{tpu_custom_call.1} parent=1 // pred_fallthru
      _
    // Predicated region
    $region22: #{tpu_custom_call.1} parent=1 // pred_check
      _
    $region23: #{tpu_custom_call.1} parent=1 // pred_check_branch
      %24 = sbr.rel (0) target = $region25
    $region24: #{tpu_custom_call.1} parent=1 // pred_region
      _
    $region25: #{tpu_custom_call.1} parent=1 // pred_fallthru
      _
    // Predicated region
    $region26: #{tpu_custom_call.1} parent=1 // pred_check
      _
    $region27: #{tpu_custom_call.1} parent=1 // pred_check_branch
      %26 = sbr.rel (0) target = $region29
    $region28: #{tpu_custom_call.1} parent=1 // pred_region
      _
    $region29: #{tpu_custom_call.1} parent=1 // pred_fallthru
      _
    %v27 = vld [vmem:[%s0] sm:$0xf]
    %v28 = vld [vmem:[%s1] sm:$0xff]
    %v29 = vld [vmem:[%s1 + $0x8] sm:$0xff]
    %v30 = vld [vmem:[%s1 + $0x10] sm:$0xf]
    %v31 = vld [vmem:[%s2] sm:$0xff]
    %v32 = vld [vmem:[%s2 + $0x8] sm:$0xff]
    %v33 = vld [vmem:[%s2 + $0x10] sm:$0xf]
    %35 = vset.pattern.permute.xlu0 0
    %36 = vperm.xlu0 %35, %v31
    %v37 = vpop.permute.xlu0 %36
    %40 = vset.pattern.permute.xlu0 0
    %41 = vperm.xlu0 %40, %v32
    %v42 = vpop.permute.xlu0 %41
    %45 = vset.pattern.permute.xlu0 0
    %46 = vperm.xlu0 %45, %v33
    %v47 = vpop.permute.xlu0 %46
    %vm49 = vcmask 31744
    %v51 = vsel %vm49, %v28, 0
    %v54 = vsel %vm49, %v29, 0
    %v57 = vsel %vm49, %v30, 0
    %vm59 = vcmask 1043456
    %v61 = vsel %vm59, %v27, 0
    %63 = vmatprep.subr.mxu0 0.0
    %64 = vmatpush1.msra.mxu0 %v61
    %65 = vmatprep.subr.mxu0 0.0
    %66 = vmatpush1.msra.mxu0 0.0
    %67 = vmatprep.subr.mxu0 0.0
    %68 = vmatpush1.msra.mxu0 0.0
    %69 = vmatprep.subr.mxu0 0.0
    %70 = vmatpush1.msra.mxu0 0.0
    %71 = vmatprep.subr.mxu0 0.0
    %72 = vmatpush1.msra.mxu0 0.0
    %73 = vmatprep.subr.mxu0 0.0
    %74 = vmatpush1.msra.mxu0 0.0
    %75 = vmatprep.subr.mxu0 0.0
    %76 = vmatpush1.msra.mxu0 0.0
    %77 = vmatprep.subr.mxu0 0.0
    %78 = vmatpush1.msra.mxu0 0.0
    %79 = vmatprep.subr.mxu0 0.0
    %80 = vmatpush1.msra.mxu0 0.0
    %81 = vmatprep.subr.mxu0 0.0
    %82 = vmatpush1.msra.mxu0 0.0
    %83 = vmatprep.subr.mxu0 0.0
    %84 = vmatpush1.msra.mxu0 0.0
    %85 = vmatprep.subr.mxu0 0.0
    %86 = vmatpush1.msra.mxu0 0.0
    %87 = vmatprep.subr.mxu0 0.0
    %88 = vmatpush1.msra.mxu0 0.0
    %89 = vmatprep.subr.mxu0 0.0
    %90 = vmatpush1.msra.mxu0 0.0
    %91 = vmatprep.subr.mxu0 0.0
    %92 = vmatpush1.msra.mxu0 0.0
    %93 = vmatprep.subr.mxu0 0.0
    %94 = vmatpush1.msra.mxu0 0.0
    %95 = vmatprep.subr.mxu0 0.0
    %96 = vmatpush1.msra.mxu0 0.0
    %97 = vmatprep.subr.mxu0 0.0
    %98 = vmatpush1.msra.mxu0 0.0
    %99 = vmatprep.subr.mxu0 0.0
    %100 = vmatpush1.msra.mxu0 0.0
    %101 = vmatprep.subr.mxu0 0.0
    %102 = vmatpush1.msra.mxu0 0.0
    %103 = vmatprep.subr.mxu0 0.0
    %104 = vmatpush1.msra.mxu0 0.0
    %105 = vmatprep.subr.mxu0 0.0
    %106 = vmatpush1.msra.mxu0 0.0
    %107 = vmatprep.subr.mxu0 0.0
    %108 = vmatpush1.msra.mxu0 0.0
    %109 = vmatprep.subr.mxu0 0.0
    %110 = vmatpush1.msra.mxu0 0.0
    %111 = vmatprep.subr.mxu0 0.0
    %112 = vmatpush1.msra.mxu0 0.0
    %113 = vmatprep.subr.mxu0 0.0
    %114 = vmatpush1.msra.mxu0 0.0
    %115 = vmatprep.subr.mxu0 0.0
    %116 = vmatpush1.msra.mxu0 0.0
    %117 = vmatprep.subr.mxu0 0.0
    %118 = vmatpush1.msra.mxu0 0.0
    %119 = vmatprep.subr.mxu0 0.0
    %120 = vmatpush1.msra.mxu0 0.0
    %121 = vmatprep.subr.mxu0 0.0
    %122 = vmatpush1.msra.mxu0 0.0
    %123 = vmatprep.subr.mxu0 0.0
    %124 = vmatpush1.msra.mxu0 0.0
    %125 = vmatprep.subr.mxu0 0.0
    %126 = vmatpush1.msra.mxu0 0.0
    %127 = vmatprep.mubr.f32.mxu0 0.0
    %128 = vmatmul.mubr.f32.gmra.mrb[0].mxu0 %v51
    %v129 = vpop.f32.mrb[0].mxu0
    %v130 = vadd.f32 %v37, %v129
    %v131 = vpop.f32.mrb[0].mxu0
    %132 = vmatprep.mubr.f32.mxu0 0.0
    %133 = vmatmul.mubr.f32.gmra.mrb[0].mxu0 %v54
    %v134 = vpop.f32.mrb[0].mxu0
    %v135 = vadd.f32 %v42, %v134
    %v136 = vpop.f32.mrb[0].mxu0
    %137 = vmatprep.mubr.f32.mxu0 0.0
    %138 = vmatmul.mubr.f32.gmra.mrb[0].mxu0 %v57
    %v139 = vpop.f32.mrb[0].mxu0
    %v140 = vadd.f32 %v47, %v139
    %v141 = vpop.f32.mrb[0].mxu0
    %142 = vdwg.mxu0
    %v143 = vmax.f32 %v130, 0.0
    %v144 = vmax.f32 %v135, 0.0
    %v145 = vmax.f32 %v140, 0.0
    %v146 = vld [vmem:[%s3] sm:$0xff]
    %v147 = vld [vmem:[%s3 + $0x8] sm:$0xff]
    %v148 = vld [vmem:[%s3 + $0x10] sm:$0xf]
    %v149 = vld [vmem:[%s4] sm:$0xff]
    %v150 = vld [vmem:[%s4 + $0x8] sm:$0xff]
    %v151 = vld [vmem:[%s4 + $0x10] sm:$0xf]
    %153 = vset.pattern.permute.xlu0 0
    %154 = vperm.xlu0 %153, %v149
    %v155 = vpop.permute.xlu0 %154
    %158 = vset.pattern.permute.xlu0 0
    %159 = vperm.xlu0 %158, %v150
    %v160 = vpop.permute.xlu0 %159
    %163 = vset.pattern.permute.xlu0 0
    %164 = vperm.xlu0 %163, %v151
    %v165 = vpop.permute.xlu0 %164
    %vm167 = vcmask 162816
    %v169 = vsel %vm167, %v146, 0
    %v172 = vsel %vm167, %v147, 0
    %v175 = vsel %vm167, %v148, 0
    %v178 = vsel %vm59, %v145, 0
    %180 = vmatprep.subr.mxu0 0.0
    %181 = vmatpush1.msra.mxu0 %v143
    %182 = vmatprep.subr.mxu0 0.0
    %183 = vmatpush1.msra.mxu0 %v144
    %184 = vmatprep.subr.mxu0 0.0
    %185 = vmatpush1.msra.mxu0 %v178
    %186 = vmatprep.subr.mxu0 0.0
    %187 = vmatpush1.msra.mxu0 0.0
    %188 = vmatprep.subr.mxu0 0.0
    %189 = vmatpush1.msra.mxu0 0.0
    %190 = vmatprep.subr.mxu0 0.0
    %191 = vmatpush1.msra.mxu0 0.0
    %192 = vmatprep.subr.mxu0 0.0
    %193 = vmatpush1.msra.mxu0 0.0
    %194 = vmatprep.subr.mxu0 0.0
    %195 = vmatpush1.msra.mxu0 0.0
    %196 = vmatprep.subr.mxu0 0.0
    %197 = vmatpush1.msra.mxu0 0.0
    %198 = vmatprep.subr.mxu0 0.0
    %199 = vmatpush1.msra.mxu0 0.0
    %200 = vmatprep.subr.mxu0 0.0
    %201 = vmatpush1.msra.mxu0 0.0
    %202 = vmatprep.subr.mxu0 0.0
    %203 = vmatpush1.msra.mxu0 0.0
    %204 = vmatprep.subr.mxu0 0.0
    %205 = vmatpush1.msra.mxu0 0.0
    %206 = vmatprep.subr.mxu0 0.0
    %207 = vmatpush1.msra.mxu0 0.0
    %208 = vmatprep.subr.mxu0 0.0
    %209 = vmatpush1.msra.mxu0 0.0
    %210 = vmatprep.subr.mxu0 0.0
    %211 = vmatpush1.msra.mxu0 0.0
    %212 = vmatprep.subr.mxu0 0.0
    %213 = vmatpush1.msra.mxu0 0.0
    %214 = vmatprep.subr.mxu0 0.0
    %215 = vmatpush1.msra.mxu0 0.0
    %216 = vmatprep.subr.mxu0 0.0
    %217 = vmatpush1.msra.mxu0 0.0
    %218 = vmatprep.subr.mxu0 0.0
    %219 = vmatpush1.msra.mxu0 0.0
    %220 = vmatprep.subr.mxu0 0.0
    %221 = vmatpush1.msra.mxu0 0.0
    %222 = vmatprep.subr.mxu0 0.0
    %223 = vmatpush1.msra.mxu0 0.0
    %224 = vmatprep.subr.mxu0 0.0
    %225 = vmatpush1.msra.mxu0 0.0
    %226 = vmatprep.subr.mxu0 0.0
    %227 = vmatpush1.msra.mxu0 0.0
    %228 = vmatprep.subr.mxu0 0.0
    %229 = vmatpush1.msra.mxu0 0.0
    %230 = vmatprep.subr.mxu0 0.0
    %231 = vmatpush1.msra.mxu0 0.0
    %232 = vmatprep.subr.mxu0 0.0
    %233 = vmatpush1.msra.mxu0 0.0
    %234 = vmatprep.subr.mxu0 0.0
    %235 = vmatpush1.msra.mxu0 0.0
    %236 = vmatprep.subr.mxu0 0.0
    %237 = vmatpush1.msra.mxu0 0.0
    %238 = vmatprep.subr.mxu0 0.0
    %239 = vmatpush1.msra.mxu0 0.0
    %240 = vmatprep.subr.mxu0 0.0
    %241 = vmatpush1.msra.mxu0 0.0
    %242 = vmatprep.subr.mxu0 0.0
    %243 = vmatpush1.msra.mxu0 0.0
    %244 = vmatprep.mubr.f32.mxu0 0.0
    %245 = vmatmul.mubr.f32.gmra.mrb[0].mxu0 %v169
    %v246 = vpop.f32.mrb[0].mxu0
    %v247 = vadd.f32 %v155, %v246
    %v248 = vpop.f32.mrb[0].mxu0
    %249 = vmatprep.mubr.f32.mxu0 0.0
    %250 = vmatmul.mubr.f32.gmra.mrb[0].mxu0 %v172
    %v251 = vpop.f32.mrb[0].mxu0
    %v252 = vadd.f32 %v160, %v251
    %v253 = vpop.f32.mrb[0].mxu0
    %254 = vmatprep.mubr.f32.mxu0 0.0
    %255 = vmatmul.mubr.f32.gmra.mrb[0].mxu0 %v175
    %v256 = vpop.f32.mrb[0].mxu0
    %v257 = vadd.f32 %v165, %v256
    %v258 = vpop.f32.mrb[0].mxu0
    %259 = vdwg.mxu0
    %v260 = vmax.f32 %v247, 0.0
    %v261 = vmax.f32 %v252, 0.0
    %v262 = vmax.f32 %v257, 0.0
    %v263 = vld [vmem:[%s5] sm:$0x7]
    %v264 = vld [vmem:[%s6] sm:$0x7]
    %266 = vset.pattern.permute.xlu0 0
    %267 = vperm.xlu0 %266, %v264
    %v268 = vpop.permute.xlu0 %267
    %v271 = vsel %vm167, %v263, 0
    %v274 = vsel %vm59, %v262, 0
    %276 = vmatprep.subr.mxu0 0.0
    %277 = vmatpush1.msra.mxu0 %v260
    %278 = vmatprep.subr.mxu0 0.0
    %279 = vmatpush1.msra.mxu0 %v261
    %280 = vmatprep.subr.mxu0 0.0
    %281 = vmatpush1.msra.mxu0 %v274
    %282 = vmatprep.subr.mxu0 0.0
    %283 = vmatpush1.msra.mxu0 0.0
    %284 = vmatprep.subr.mxu0 0.0
    %285 = vmatpush1.msra.mxu0 0.0
    %286 = vmatprep.subr.mxu0 0.0
    %287 = vmatpush1.msra.mxu0 0.0
    %288 = vmatprep.subr.mxu0 0.0
    %289 = vmatpush1.msra.mxu0 0.0
    %290 = vmatprep.subr.mxu0 0.0
    %291 = vmatpush1.msra.mxu0 0.0
    %292 = vmatprep.subr.mxu0 0.0
    %293 = vmatpush1.msra.mxu0 0.0
    %294 = vmatprep.subr.mxu0 0.0
    %295 = vmatpush1.msra.mxu0 0.0
    %296 = vmatprep.subr.mxu0 0.0
    %297 = vmatpush1.msra.mxu0 0.0
    %298 = vmatprep.subr.mxu0 0.0
    %299 = vmatpush1.msra.mxu0 0.0
    %300 = vmatprep.subr.mxu0 0.0
    %301 = vmatpush1.msra.mxu0 0.0
    %302 = vmatprep.subr.mxu0 0.0
    %303 = vmatpush1.msra.mxu0 0.0
    %304 = vmatprep.subr.mxu0 0.0
    %305 = vmatpush1.msra.mxu0 0.0
    %306 = vmatprep.subr.mxu0 0.0
    %307 = vmatpush1.msra.mxu0 0.0
    %308 = vmatprep.subr.mxu0 0.0
    %309 = vmatpush1.msra.mxu0 0.0
    %310 = vmatprep.subr.mxu0 0.0
    %311 = vmatpush1.msra.mxu0 0.0
    %312 = vmatprep.subr.mxu0 0.0
    %313 = vmatpush1.msra.mxu0 0.0
    %314 = vmatprep.subr.mxu0 0.0
    %315 = vmatpush1.msra.mxu0 0.0
    %316 = vmatprep.subr.mxu0 0.0
    %317 = vmatpush1.msra.mxu0 0.0
    %318 = vmatprep.subr.mxu0 0.0
    %319 = vmatpush1.msra.mxu0 0.0
    %320 = vmatprep.subr.mxu0 0.0
    %321 = vmatpush1.msra.mxu0 0.0
    %322 = vmatprep.subr.mxu0 0.0
    %323 = vmatpush1.msra.mxu0 0.0
    %324 = vmatprep.subr.mxu0 0.0
    %325 = vmatpush1.msra.mxu0 0.0
    %326 = vmatprep.subr.mxu0 0.0
    %327 = vmatpush1.msra.mxu0 0.0
    %328 = vmatprep.subr.mxu0 0.0
    %329 = vmatpush1.msra.mxu0 0.0
    %330 = vmatprep.subr.mxu0 0.0
    %331 = vmatpush1.msra.mxu0 0.0
    %332 = vmatprep.subr.mxu0 0.0
    %333 = vmatpush1.msra.mxu0 0.0
    %334 = vmatprep.subr.mxu0 0.0
    %335 = vmatpush1.msra.mxu0 0.0
    %336 = vmatprep.subr.mxu0 0.0
    %337 = vmatpush1.msra.mxu0 0.0
    %338 = vmatprep.subr.mxu0 0.0
    %339 = vmatpush1.msra.mxu0 0.0
    %340 = vmatprep.mubr.f32.mxu0 0.0
    %341 = vmatmul.mubr.f32.gmra.mrb[0].mxu0 %v271
    %v342 = vpop.f32.mrb[0].mxu0
    %v343 = vadd.f32 %v268, %v342
    %v344 = vpop.f32.mrb[0].mxu0
    %345 = vdwg.mxu0
    %vm346 = vcmask 1042432
    %v347 = vsel %vm346, %v343, -inf
    %v348 = vrot.slane %v347, 4
    %v349 = vmax.f32 %v347, %v348
    %v350 = vrot.slane %v349, 2
    %v351 = vmax.f32 %v349, %v350
    %v352 = vrot.slane %v351, 1
    %v353 = vmax.f32 %v351, %v352
    %v354 = vsub.f32 %v343, %v353
    %v355 = vmul.f32 %v354, 1.442695
    %v356 = vpow.pop %v355
    %v357 = vsel %vm346, %v356, 0.0
    %v358 = vrot.slane %v357, 4
    %v359 = vadd.f32 %v357, %v358
    %v360 = vrot.slane %v359, 2
    %v361 = vadd.f32 %v359, %v360
    %v362 = vrot.slane %v361, 1
    %v363 = vadd.f32 %v361, %v362
    %v364 = vrcp.pop %v363
    %v365 = vmul.f32 %v356, %v364
    %v366 = vmul.f32 %v365, 1.442695
    %v367 = vpow.pop %v366
    %v368 = vsel %vm346, %v367, 0.0
    %v369 = vrot.slane %v368, 4
    %v370 = vadd.f32 %v368, %v369
    %v371 = vrot.slane %v370, 2
    %v372 = vadd.f32 %v370, %v371
    %v373 = vrot.slane %v372, 1
    %v374 = vadd.f32 %v372, %v373
    %v375 = vrcp.pop %v374
    %v376 = vmul.f32 %v367, %v375
    %377 = vst [vmem:[#allocation2] sm:$0x7] %v376
    // Predicated region
    $region30: #{tpu_custom_call.1} parent=1 // pred_check
      _
    $region31: #{tpu_custom_call.1} parent=1 // pred_check_branch
      %379 = sbr.rel (0) target = $region33
    $region32: #{tpu_custom_call.1} parent=1 // pred_region
      %s381 = ssub.s32 64, 64
      %382 = vsyncadd [#allocation3], %s381
      %s384 = sshll.u32 [#allocation2], 4
      %s385 = int_to_ptr.vmem [resolvable:$true] %s384
      %387 = dma.vmem_to_hbm [thread:$0]  %s385, 64, %s7, [#allocation3]
    $region33: #{tpu_custom_call.1} parent=1 // pred_fallthru
      _
    // Predicated region
    $region34: #{tpu_custom_call.1} parent=1 // pred_check
      _
    $region35: #{tpu_custom_call.1} parent=1 // pred_check_branch
      %389 = sbr.rel (0) target = $region37
    $region36: #{tpu_custom_call.1} parent=1 // pred_region
      %390 = dma.done [#allocation3], 64
    $region37: #{tpu_custom_call.1} parent=1 // pred_fallthru
      _
    %391 = vsyncpa [#allocation3], 1

</llo_original>
